<compile_context>
chip_gen: v6e
topology: v6e:2x2x1
jax: 0.10.0
libtpu: 0.0.40
codegen_flags: <defaults>
</compile_context>

<pallas_src>
import functools

import jax
import jax.numpy as jnp
from jax.experimental import pallas as pl
from jax.experimental.pallas import tpu as pltpu

BN_EPS = 1e-5
_TILE_N = 1024        # rows per grid step (multiple of 32); ~0.3 MiB/step of VMEM
_ROW_ALIGN = 32       # pad N to a multiple of 32 so (N,4) <-> (N/32,128) repack is free


def _round_up(x, m):
    return (x + m - 1) // m * m


# --------------------------- pass A: BN1 statistics ---------------------------
def _stats1_kernel(x_ref, w1_ref, stats_ref):
    # h = x @ W1  (Linear bias dropped: exactly cancelled by BN mean subtraction)
    h = jnp.dot(x_ref[...], w1_ref[...], preferred_element_type=jnp.float32)
    # Per-feature sum / sum-of-squares via the (otherwise idle) MXU instead of a
    # sublane (axis=0) VPU/XLU reduce.  Zero-padded rows contribute exactly 0
    # because there is no bias, so no masking is needed here.
    ones_row = jnp.ones((1, h.shape[0]), jnp.float32)
    stats_ref[0:1, :] = jnp.dot(ones_row, h, preferred_element_type=jnp.float32)
    stats_ref[1:2, :] = jnp.dot(ones_row, h * h, preferred_element_type=jnp.float32)


# ------------------ pass B: BN1 + ReLU + Linear2, BN2 statistics ----------------
def _apply1_kernel(x_ref, w1_ref, w2_ref, sc1_ref, sh1_ref,
                   o_ref, stats_ref, *, n_valid, tile, needs_mask):
    h = jnp.dot(x_ref[...], w1_ref[...], preferred_element_type=jnp.float32)
    z = jnp.maximum(h * sc1_ref[...] + sh1_ref[...], 0.0)        # folded BN1 + ReLU
    o = jnp.dot(z.astype(w2_ref.dtype), w2_ref[...],
                preferred_element_type=jnp.float32)               # Linear2 (no bias)
    o_ref[...] = o

    # BN2 statistics must exclude zero-padded rows (BN1's shift makes them nonzero).
    o_stat = o
    if needs_mask:
        row = (pl.program_id(0) * tile
               + jax.lax.broadcasted_iota(jnp.int32, (tile, 1), 0))
        o_stat = o * (row < n_valid).astype(jnp.float32)
    ones_row = jnp.ones((1, tile), jnp.float32)
    stats_ref[0:1, :] = jnp.dot(ones_row, o_stat, preferred_element_type=jnp.float32)
    stats_ref[1:2, :] = jnp.dot(ones_row, o_stat * o_stat,
                                preferred_element_type=jnp.float32)


# ------------------------ pass C: lane-dense BN2 + ReLU --------------------------
def _apply2_kernel(o_ref, sc2_ref, sh2_ref, out_ref):
    # o is presented as (rows/32, 128): 32 logical rows x 4 features per vreg row,
    # so loads/stores are full-128-lane vectors instead of 4-wide masked vst.msk.
    out_ref[...] = jnp.maximum(o_ref[...] * sc2_ref[...] + sh2_ref[...], 0.0)


def _finalize_scale_shift(partial_stats, gamma, beta, n_valid):
    """Tiny finalize in plain JAX: fold BN into a single scale/shift."""
    stats = partial_stats.sum(axis=0)                    # (2, F)
    mean = stats[0] / n_valid                            # (F,)
    var = jnp.maximum(stats[1] / n_valid - mean * mean, 0.0)   # one-pass, biased
    scale = gamma * jax.lax.rsqrt(var + BN_EPS)          # (1, F)
    shift = beta - mean * scale                          # (1, F)
    return scale, shift


def box_refinement_forward(node_embeddings, params, *, tile_n=_TILE_N):
    """Forward pass of BoxRefinementNetwork (training-mode BatchNorm).

    node_embeddings: (B, nodes, emb) or (N, emb); float32 or bfloat16
      (matmuls run in the input dtype with f32 accumulation; BN/output in f32).
    params: w1 (emb,hidden), w2 (hidden,4), g1/be1 (1,hidden), g2/be2 (1,4).
      b1/b2 may be present but are unused: BN mean subtraction cancels them.
    """
    orig_ndim = node_embeddings.ndim
    if orig_ndim == 3:
        b, n_nodes, e = node_embeddings.shape
        x2d = node_embeddings.reshape(b * n_nodes, e)
    elif orig_ndim == 2:
        x2d = node_embeddings
    else:
        raise ValueError("expected 2D or 3D input")

    n, emb = x2d.shape
    hidden = params["w1"].shape[1]
    out_dim = params["w2"].shape[1]          # 4 (box_net_dim)
    cdt = x2d.dtype                          # compute dtype for the matmuls
    xbytes = jnp.dtype(cdt).itemsize

    # Row tiling: pad N so every tile is full; padded rows are masked out of the
    # BN statistics and sliced off the output.
    if n <= tile_n:
        n_pad = _round_up(max(n, 1), _ROW_ALIGN)
        tile = n_pad
    else:
        n_pad = _round_up(n, tile_n)
        tile = tile_n
    grid_n = n_pad // tile
    if n_pad != n:
        x2d = jnp.pad(x2d, ((0, n_pad - n), (0, 0)))

    w1 = params["w1"].astype(cdt)
    w2 = params["w2"].astype(cdt)

    cparams = pltpu.CompilerParams(
        dimension_semantics=("parallel",),          # per-tile stats -> no accumulation
        vmem_limit_bytes=32 * 1024 * 1024,          # safe on v5e/v6e/v7x; tiles are tiny
    )
    x_spec = pl.BlockSpec((tile, emb), lambda i: (i, 0))
    w1_spec = pl.BlockSpec((emb, hidden), lambda i: (0, 0))
    w2_spec = pl.BlockSpec((hidden, out_dim), lambda i: (0, 0))
    vec_h = pl.BlockSpec((1, hidden), lambda i: (0, 0))

    # ---- pass A: per-tile partial BN1 statistics --------------------------------
    stats1_partial = pl.pallas_call(
        _stats1_kernel,
        out_shape=jax.ShapeDtypeStruct((grid_n, 2, hidden), jnp.float32),
        grid=(grid_n,),
        in_specs=[x_spec, w1_spec],
        out_specs=pl.BlockSpec((None, 2, hidden), lambda i: (i, 0, 0)),
        compiler_params=cparams,
        cost_estimate=pl.CostEstimate(
            flops=2 * n_pad * emb * hidden + 4 * n_pad * hidden,
            transcendentals=0,
            bytes_accessed=n_pad * emb * xbytes + emb * hidden * xbytes
            + grid_n * 2 * hidden * 4),
    )(x2d, w1)
    scale1, shift1 = _finalize_scale_shift(
        stats1_partial, params["g1"], params["be1"], n)

    # ---- pass B: BN1 + ReLU + Linear2, per-tile partial BN2 statistics ----------
    o_pre, stats2_partial = pl.pallas_call(
        functools.partial(_apply1_kernel, n_valid=n, tile=tile,
                          needs_mask=(n_pad != n)),
        out_shape=(jax.ShapeDtypeStruct((n_pad, out_dim), jnp.float32),
                   jax.ShapeDtypeStruct((grid_n, 2, out_dim), jnp.float32)),
        grid=(grid_n,),
        in_specs=[x_spec, w1_spec, w2_spec, vec_h, vec_h],
        out_specs=(pl.BlockSpec((tile, out_dim), lambda i: (i, 0)),
                   pl.BlockSpec((None, 2, out_dim), lambda i: (i, 0, 0))),
        compiler_params=cparams,
        cost_estimate=pl.CostEstimate(
            flops=2 * n_pad * hidden * (emb + out_dim) + 3 * n_pad * hidden,
            transcendentals=0,
            bytes_accessed=n_pad * emb * xbytes + n_pad * out_dim * 4
            + (emb + out_dim) * hidden * xbytes),
    )(x2d, w1, w2, scale1, shift1)
    scale2, shift2 = _finalize_scale_shift(
        stats2_partial, params["g2"], params["be2"], n)

    # ---- pass C: lane-dense BN2 + ReLU -------------------------------------------
    # (n_pad, 4) row-major has the same contiguous bytes as (n_pad // 32, 128), so
    # the wrapper reshape is free and the kernel sees full-lane loads/stores.
    lanes = 128
    group = lanes // out_dim                   # 32 logical rows per 128-lane row
    rows = n_pad // group                      # n_pad is a multiple of 32
    tile_r = tile // group
    o_dense = o_pre.reshape(rows, lanes)
    sc2_dense = jnp.tile(scale2.astype(jnp.float32), (1, group))
    sh2_dense = jnp.tile(shift2.astype(jnp.float32), (1, group))
    out_dense = pl.pallas_call(
        _apply2_kernel,
        out_shape=jax.ShapeDtypeStruct((rows, lanes), jnp.float32),
        grid=(grid_n,),
        in_specs=[pl.BlockSpec((tile_r, lanes), lambda i: (i, 0)),
                  pl.BlockSpec((1, lanes), lambda i: (0, 0)),
                  pl.BlockSpec((1, lanes), lambda i: (0, 0))],
        out_specs=pl.BlockSpec((tile_r, lanes), lambda i: (i, 0)),
        compiler_params=cparams,
        cost_estimate=pl.CostEstimate(
            flops=3 * rows * lanes, transcendentals=0,
            bytes_accessed=2 * rows * lanes * 4),
    )(o_dense, sc2_dense, sh2_dense)

    out2d = out_dense.reshape(n_pad, out_dim)[:n]
    if orig_ndim == 3:
        return out2d.reshape(b, n_nodes, out_dim)
    return out2d


def init_params(key, emb_dim, hidden_dim):
    """Deterministic synthetic parameters (shapes match the PyTorch module)."""
    k1, k2, k3, k4 = jax.random.split(key, 4)
    # Linear weights stored transposed: (in, out), so kernels do x @ W.
    w1 = (jax.random.uniform(k1, (emb_dim, hidden_dim), jnp.float32, -1.0, 1.0)
          / jnp.sqrt(emb_dim).astype(jnp.float32))
    b1 = (jax.random.uniform(k2, (1, hidden_dim), jnp.float32, -1.0, 1.0)
          / jnp.sqrt(emb_dim).astype(jnp.float32))
    w2 = (jax.random.uniform(k3, (hidden_dim, 4), jnp.float32, -1.0, 1.0)
          / jnp.sqrt(hidden_dim).astype(jnp.float32))
    b2 = (jax.random.uniform(k4, (1, 4), jnp.float32, -1.0, 1.0)
          / jnp.sqrt(hidden_dim).astype(jnp.float32))
    # BatchNorm affine params at PyTorch defaults: gamma=1, beta=0.
    g1 = jnp.ones((1, hidden_dim), jnp.float32)
    be1 = jnp.zeros((1, hidden_dim), jnp.float32)
    g2 = jnp.ones((1, 4), jnp.float32)
    be2 = jnp.zeros((1, 4), jnp.float32)
    return dict(w1=w1, b1=b1, g1=g1, be1=be1, w2=w2, b2=b2, g2=g2, be2=be2)


def _reference_forward(x, p):
    """Pure-JAX reference following PyTorch semantics exactly (biases included)."""
    orig_ndim = x.ndim
    if orig_ndim == 3:
        b, n, e = x.shape
        x = x.reshape(b * n, e)
    h = x @ p["w1"] + p["b1"]
    m = h.mean(0, keepdims=True)
    v = ((h - m) ** 2).mean(0, keepdims=True)
    h = jnp.maximum((h - m) / jnp.sqrt(v + BN_EPS) * p["g1"] + p["be1"], 0.0)
    o = h @ p["w2"] + p["b2"]
    m2 = o.mean(0, keepdims=True)
    v2 = ((o - m2) ** 2).mean(0, keepdims=True)
    o = jnp.maximum((o - m2) / jnp.sqrt(v2 + BN_EPS) * p["g2"] + p["be2"], 0.0)
    if orig_ndim == 3:
        o = o.reshape(b, n, 4)
    return o


if __name__ == "__main__":
    emb_dim, hidden_dim = 32, 32
    batch, nodes = 2, 8

    key = jax.random.PRNGKey(0)
    k_x, k_p = jax.random.split(key)
    params = init_params(k_p, emb_dim, hidden_dim)
    x = jax.random.normal(k_x, (batch, nodes, emb_dim), jnp.float32)

    out = jax.block_until_ready(box_refinement_forward(x, params))
    ref = _reference_forward(x, params)

    assert out.shape == (batch, nodes, 4), out.shape
    assert jnp.allclose(out, ref, atol=1e-4, rtol=1e-4), \
        float(jnp.max(jnp.abs(out - ref)))

    print("KERNEL_OK")
</pallas_src>

<mosaic_0001>
module attributes {stable_mosaic.version = 11 : i64} {
  func.func @_stats1_kernel(%arg0: i32, %arg1: memref<32x32xf32, #tpu.memory_space<vmem>>, %arg2: memref<32x32xf32, #tpu.memory_space<vmem>>, %arg3: memref<1x2x32xf32, #tpu.memory_space<vmem>>) attributes {dimension_semantics = [#tpu.dimension_semantics<parallel>], iteration_bounds = array<i64: 1>, scalar_prefetch = 0 : i64, scratch_operands = 0 : i64, tpu.core_type = #tpu.core_type<tc>, window_params = [{transform_indices = @transform_0, window_bounds = array<i64: 32, 32>}, {pipeline_mode = #tpu.pipeline_mode<synchronous>, transform_indices = @transform_1, window_bounds = array<i64: 32, 32>}, {transform_indices = @transform_2, window_bounds = array<i64: 1, 2, 32>}]} {
    %c0 = arith.constant 0 : index
    %c0_0 = arith.constant 0 : index
    %0 = vector.load %arg1[%c0, %c0_0] : memref<32x32xf32, #tpu.memory_space<vmem>>, vector<32x32xf32>
    %c0_1 = arith.constant 0 : index
    %c0_2 = arith.constant 0 : index
    %1 = vector.load %arg2[%c0_1, %c0_2] : memref<32x32xf32, #tpu.memory_space<vmem>>, vector<32x32xf32>
    %cst = arith.constant dense<0.000000e+00> : vector<32x32xf32>
    %2 = tpu.matmul %0, %1, %cst {dimension_numbers = #tpu.dot_dimension_numbers<[1], [0], [0], [1], [0, 0, 1, 1], [], []>} : vector<32x32xf32>, vector<32x32xf32>, vector<32x32xf32> -> vector<32x32xf32>
    %cst_3 = arith.constant 1.000000e+00 : f32
    %3 = vector.broadcast %cst_3 : f32 to vector<1x32xf32>
    %cst_4 = arith.constant dense<0.000000e+00> : vector<1x32xf32>
    %4 = tpu.matmul %3, %2, %cst_4 {dimension_numbers = #tpu.dot_dimension_numbers<[1], [0], [0], [1], [0, 0, 1, 1], [], []>} : vector<1x32xf32>, vector<32x32xf32>, vector<1x32xf32> -> vector<1x32xf32>
    %c0_5 = arith.constant 0 : index
    %c0_6 = arith.constant 0 : index
    %c0_7 = arith.constant 0 : index
    %5 = vector.load %arg3[%c0_5, %c0_6, %c0_7] : memref<1x2x32xf32, #tpu.memory_space<vmem>>, vector<1x1x32xf32>
    %6 = vector.shape_cast %5 : vector<1x1x32xf32> to vector<1x32xf32>
    %7 = vector.shape_cast %4 : vector<1x32xf32> to vector<1x1x32xf32>
    tpu.vector_store %arg3[%c0_5, %c0_6, %c0_7], %7 {strides = array<i32>} : memref<1x2x32xf32, #tpu.memory_space<vmem>>, vector<1x1x32xf32>,
    %8 = arith.mulf %2, %2 : vector<32x32xf32>
    %cst_8 = arith.constant dense<0.000000e+00> : vector<1x32xf32>
    %9 = tpu.matmul %3, %8, %cst_8 {dimension_numbers = #tpu.dot_dimension_numbers<[1], [0], [0], [1], [0, 0, 1, 1], [], []>} : vector<1x32xf32>, vector<32x32xf32>, vector<1x32xf32> -> vector<1x32xf32>
    %c0_9 = arith.constant 0 : index
    %c1 = arith.constant 1 : index
    %c0_10 = arith.constant 0 : index
    %10 = vector.load %arg3[%c0_9, %c1, %c0_10] : memref<1x2x32xf32, #tpu.memory_space<vmem>>, vector<1x1x32xf32>
    %11 = vector.shape_cast %10 : vector<1x1x32xf32> to vector<1x32xf32>
    %12 = vector.shape_cast %9 : vector<1x32xf32> to vector<1x1x32xf32>
    tpu.vector_store %arg3[%c0_9, %c1, %c0_10], %12 {strides = array<i32>} : memref<1x2x32xf32, #tpu.memory_space<vmem>>, vector<1x1x32xf32>,
    return
  }
  func.func @transform_0(%arg0: i32) -> (i32, i32) {
    %c0_i32 = arith.constant 0 : i32
    %c0_i32_0 = arith.constant 0 : i32
    return %arg0, %c0_i32 : i32, i32
  }
  func.func @transform_1(%arg0: i32) -> (i32, i32) {
    %c0_i32 = arith.constant 0 : i32
    %c0_i32_0 = arith.constant 0 : i32
    %c0_i32_1 = arith.constant 0 : i32
    return %c0_i32, %c0_i32_0 : i32, i32
  }
  func.func @transform_2(%arg0: i32) -> (i32, i32, i32) {
    %c0_i32 = arith.constant 0 : i32
    %c0_i32_0 = arith.constant 0 : i32
    %c0_i32_1 = arith.constant 0 : i32
    return %arg0, %c0_i32, %c0_i32_0 : i32, i32, i32
  }
}

</mosaic_0001>

<llo_original>
// kernel: tpu_custom_call.1
$region0: #{tpu_custom_call.1}
  #allocation0 [shape = 'u32[]', space=smem, size = 0x4, offset = 0x4, fixed_abs, tag = 'smem constant byte address 0x4 - core index']
  #allocation1 [shape = 'u32[144,128]{1,0:T(1,128)}', space=vmem, size = 0x12000, scoped, tag = 'internal scratch']
  %s0 = inlined_call_operand.hbm [shape: f32[32,32], index: 0, kind: input, shape index: {}]
  %s1 = inlined_call_operand.hbm [shape: f32[32,32], index: 1, kind: input, shape index: {}]
  %s2 = inlined_call_operand.hbm [shape: f32[1,2,32], index: 2, kind: output, shape index: {}]
  %s3 = sld [smem:[#allocation0]]
  $region26: #{tpu_custom_call.1} parent=0
    _
  %s5 = ssub.s32 1, %s3
  %s6 = scalar_select 0, %s5, %s3
  $region1: #{tpu_custom_call.1} parent=0
    #allocation2 [shape = 'u8[16384]{0}', space=vmem, size = 0x4000, scoped, tag = 'input window, operand 0, single buffered']
    #allocation3 [shape = 's32[1]{0}', space=sflag, size = 0x4, scoped, tag = 'scoped memory for tpu_custom_call.1']
    #allocation4 [shape = 's32[1]{0}', space=sflag, size = 0x4, scoped, tag = 'scoped memory for tpu_custom_call.1']
    #allocation5 [shape = 'u8[16384]{0}', space=vmem, size = 0x4000, scoped, tag = 'input window, operand 1, single buffered']
    #allocation6 [shape = 's32[1]{0}', space=sflag, size = 0x4, scoped, tag = 'scoped memory for tpu_custom_call.1']
    #allocation7 [shape = 'u8[1024]{0}', space=vmem, size = 0x400, scoped, tag = 'output window, operand 0, single buffered']
    %7 = vsyncpa [#allocation3], 0
    %8 = vsyncpa [#allocation6], 0
    %9 = vsyncpa [#allocation4], 0
    // Predicated region
    $region2: #{tpu_custom_call.1} parent=1 // pred_check
      _
    $region3: #{tpu_custom_call.1} parent=1 // pred_check_branch
      %11 = sbr.rel (0) target = $region5
    $region4: #{tpu_custom_call.1} parent=1 // pred_region
      %s13 = ssub.s32 512, 512
      %14 = vsyncadd [#allocation3], %s13
      %s15 = sshll.u32 [#allocation2], 4
      %s16 = int_to_ptr.vmem [resolvable:$true] %s15
      %21 = dma.hbm_to_vmem [thread:$0]  %s0, 512, %s16, [#allocation3], 128, 128, 8
    $region5: #{tpu_custom_call.1} parent=1 // pred_fallthru
      _
    // Predicated region
    $region6: #{tpu_custom_call.1} parent=1 // pred_check
      _
    $region7: #{tpu_custom_call.1} parent=1 // pred_check_branch
      %23 = sbr.rel (0) target = $region9
    $region8: #{tpu_custom_call.1} parent=1 // pred_region
      %s25 = ssub.s32 512, 512
      %26 = vsyncadd [#allocation6], %s25
      %s27 = sshll.u32 [#allocation5], 4
      %s28 = int_to_ptr.vmem [resolvable:$true] %s27
      %33 = dma.hbm_to_vmem [thread:$0]  %s1, 512, %s28, [#allocation6], 128, 128, 8
    $region9: #{tpu_custom_call.1} parent=1 // pred_fallthru
      _
    // Predicated region
    $region10: #{tpu_custom_call.1} parent=1 // pred_check
      _
    $region11: #{tpu_custom_call.1} parent=1 // pred_check_branch
      %35 = sbr.rel (0) target = $region13
    $region12: #{tpu_custom_call.1} parent=1 // pred_region
      %36 = dma.done [#allocation3], 512
    $region13: #{tpu_custom_call.1} parent=1 // pred_fallthru
      _
    // Predicated region
    $region14: #{tpu_custom_call.1} parent=1 // pred_check
      _
    $region15: #{tpu_custom_call.1} parent=1 // pred_check_branch
      %38 = sbr.rel (0) target = $region17
    $region16: #{tpu_custom_call.1} parent=1 // pred_region
      %39 = dma.done [#allocation6], 512
    $region17: #{tpu_custom_call.1} parent=1 // pred_fallthru
      _
    %v40 = vld [vmem:[#allocation2] sm:$0xff]
    %v41 = vld [vmem:[#allocation2 + $0x8] sm:$0xff]
    %v42 = vld [vmem:[#allocation2 + $0x10] sm:$0xff]
    %v43 = vld [vmem:[#allocation2 + $0x18] sm:$0xff]
    %v44 = vld [vmem:[#allocation5] sm:$0xff]
    %v45 = vld [vmem:[#allocation5 + $0x8] sm:$0xff]
    %v46 = vld [vmem:[#allocation5 + $0x10] sm:$0xff]
    %v47 = vld [vmem:[#allocation5 + $0x18] sm:$0xff]
    %vm48 = vcmask 261120
    %v50 = vsel %vm48, %v40, 0
    %v53 = vsel %vm48, %v41, 0
    %v56 = vsel %vm48, %v42, 0
    %v59 = vsel %vm48, %v43, 0
    %61 = vmatprep.subr.mxu0 0.0
    %62 = vmatpush1.msra.mxu0 0.0
    %63 = vmatprep.subr.mxu0 0.0
    %64 = vmatpush1.msra.mxu0 0.0
    %65 = vmatprep.subr.mxu0 0.0
    %66 = vmatpush1.msra.mxu0 0.0
    %67 = vmatprep.subr.mxu0 0.0
    %68 = vmatpush1.msra.mxu0 0.0
    %69 = vmatprep.subr.mxu0 0.0
    %70 = vmatpush1.msra.mxu0 0.0
    %71 = vmatprep.subr.mxu0 0.0
    %72 = vmatpush1.msra.mxu0 0.0
    %73 = vmatprep.subr.mxu0 0.0
    %74 = vmatpush1.msra.mxu0 0.0
    %75 = vmatprep.subr.mxu0 0.0
    %76 = vmatpush1.msra.mxu0 0.0
    %77 = vmatprep.subr.mxu0 0.0
    %78 = vmatpush1.msra.mxu0 0.0
    %79 = vmatprep.subr.mxu0 0.0
    %80 = vmatpush1.msra.mxu0 0.0
    %81 = vmatprep.subr.mxu0 0.0
    %82 = vmatpush1.msra.mxu0 0.0
    %83 = vmatprep.subr.mxu0 0.0
    %84 = vmatpush1.msra.mxu0 0.0
    %85 = vmatprep.subr.mxu0 0.0
    %86 = vmatpush1.msra.mxu0 %v47
    %87 = vmatprep.subr.mxu0 0.0
    %88 = vmatpush1.msra.mxu0 %v46
    %89 = vmatprep.subr.mxu0 0.0
    %90 = vmatpush1.msra.mxu0 %v45
    %91 = vmatprep.subr.mxu0 0.0
    %92 = vmatpush1.msra.mxu0 %v44
    %93 = vmatprep.subr.mxu0 0.0
    %94 = vmatpush2.msra.mxu0 0.0
    %95 = vmatprep.subr.mxu0 0.0
    %96 = vmatpush2.msra.mxu0 0.0
    %97 = vmatprep.subr.mxu0 0.0
    %98 = vmatpush2.msra.mxu0 0.0
    %99 = vmatprep.subr.mxu0 0.0
    %100 = vmatpush2.msra.mxu0 0.0
    %101 = vmatprep.subr.mxu0 0.0
    %102 = vmatpush2.msra.mxu0 0.0
    %103 = vmatprep.subr.mxu0 0.0
    %104 = vmatpush2.msra.mxu0 0.0
    %105 = vmatprep.subr.mxu0 0.0
    %106 = vmatpush2.msra.mxu0 0.0
    %107 = vmatprep.subr.mxu0 0.0
    %108 = vmatpush2.msra.mxu0 0.0
    %109 = vmatprep.subr.mxu0 0.0
    %110 = vmatpush2.msra.mxu0 0.0
    %111 = vmatprep.subr.mxu0 0.0
    %112 = vmatpush2.msra.mxu0 0.0
    %113 = vmatprep.subr.mxu0 0.0
    %114 = vmatpush2.msra.mxu0 0.0
    %115 = vmatprep.subr.mxu0 0.0
    %116 = vmatpush2.msra.mxu0 0.0
    %117 = vmatprep.subr.mxu0 0.0
    %118 = vmatpush2.msra.mxu0 0.0
    %119 = vmatprep.subr.mxu0 0.0
    %120 = vmatpush2.msra.mxu0 0.0
    %121 = vmatprep.subr.mxu0 0.0
    %122 = vmatpush2.msra.mxu0 0.0
    %123 = vmatprep.subr.mxu0 0.0
    %124 = vmatpush2.msra.mxu0 0.0
    %125 = vmatprep.mubr.f32.mxu0 0.0
    %126 = vmatmul.mubr.f32.gmra.mxu0 %v50
    %v127 = vpop.f32.mrf.mxu0
    %v128 = vadd.f32 0.0, %v127
    %v129 = vpop.f32.mrf.mxu0
    %130 = vmatprep.mubr.f32.mxu0 0.0
    %131 = vmatmul.mubr.f32.gmra.mxu0 %v53
    %v132 = vpop.f32.mrf.mxu0
    %v133 = vadd.f32 0.0, %v132
    %v134 = vpop.f32.mrf.mxu0
    %135 = vmatprep.mubr.f32.mxu0 0.0
    %136 = vmatmul.mubr.f32.gmra.mxu0 %v56
    %v137 = vpop.f32.mrf.mxu0
    %v138 = vadd.f32 0.0, %v137
    %v139 = vpop.f32.mrf.mxu0
    %140 = vmatprep.mubr.f32.mxu0 0.0
    %141 = vmatmul.mubr.f32.gmra.mxu0 %v59
    %v142 = vpop.f32.mrf.mxu0
    %v143 = vadd.f32 0.0, %v142
    %v144 = vpop.f32.mrf.mxu0
    %145 = vdwg.mxu0
    %v147 = vsel %vm48, 1.0, 0
    %149 = vmatprep.subr.mxu0 0.0
    %150 = vmatpush1.msra.mxu0 0.0
    %151 = vmatprep.subr.mxu0 0.0
    %152 = vmatpush1.msra.mxu0 0.0
    %153 = vmatprep.subr.mxu0 0.0
    %154 = vmatpush1.msra.mxu0 0.0
    %155 = vmatprep.subr.mxu0 0.0
    %156 = vmatpush1.msra.mxu0 0.0
    %157 = vmatprep.subr.mxu0 0.0
    %158 = vmatpush1.msra.mxu0 0.0
    %159 = vmatprep.subr.mxu0 0.0
    %160 = vmatpush1.msra.mxu0 0.0
    %161 = vmatprep.subr.mxu0 0.0
    %162 = vmatpush1.msra.mxu0 0.0
    %163 = vmatprep.subr.mxu0 0.0
    %164 = vmatpush1.msra.mxu0 0.0
    %165 = vmatprep.subr.mxu0 0.0
    %166 = vmatpush1.msra.mxu0 0.0
    %167 = vmatprep.subr.mxu0 0.0
    %168 = vmatpush1.msra.mxu0 0.0
    %169 = vmatprep.subr.mxu0 0.0
    %170 = vmatpush1.msra.mxu0 0.0
    %171 = vmatprep.subr.mxu0 0.0
    %172 = vmatpush1.msra.mxu0 0.0
    %173 = vmatprep.subr.mxu0 0.0
    %174 = vmatpush1.msra.mxu0 %v143
    %175 = vmatprep.subr.mxu0 0.0
    %176 = vmatpush1.msra.mxu0 %v138
    %177 = vmatprep.subr.mxu0 0.0
    %178 = vmatpush1.msra.mxu0 %v133
    %179 = vmatprep.subr.mxu0 0.0
    %180 = vmatpush1.msra.mxu0 %v128
    %181 = vmatprep.subr.mxu0 0.0
    %182 = vmatpush2.msra.mxu0 0.0
    %183 = vmatprep.subr.mxu0 0.0
    %184 = vmatpush2.msra.mxu0 0.0
    %185 = vmatprep.subr.mxu0 0.0
    %186 = vmatpush2.msra.mxu0 0.0
    %187 = vmatprep.subr.mxu0 0.0
    %188 = vmatpush2.msra.mxu0 0.0
    %189 = vmatprep.subr.mxu0 0.0
    %190 = vmatpush2.msra.mxu0 0.0
    %191 = vmatprep.subr.mxu0 0.0
    %192 = vmatpush2.msra.mxu0 0.0
    %193 = vmatprep.subr.mxu0 0.0
    %194 = vmatpush2.msra.mxu0 0.0
    %195 = vmatprep.subr.mxu0 0.0
    %196 = vmatpush2.msra.mxu0 0.0
    %197 = vmatprep.subr.mxu0 0.0
    %198 = vmatpush2.msra.mxu0 0.0
    %199 = vmatprep.subr.mxu0 0.0
    %200 = vmatpush2.msra.mxu0 0.0
    %201 = vmatprep.subr.mxu0 0.0
    %202 = vmatpush2.msra.mxu0 0.0
    %203 = vmatprep.subr.mxu0 0.0
    %204 = vmatpush2.msra.mxu0 0.0
    %205 = vmatprep.subr.mxu0 0.0
    %206 = vmatpush2.msra.mxu0 0.0
    %207 = vmatprep.subr.mxu0 0.0
    %208 = vmatpush2.msra.mxu0 0.0
    %209 = vmatprep.subr.mxu0 0.0
    %210 = vmatpush2.msra.mxu0 0.0
    %211 = vmatprep.subr.mxu0 0.0
    %212 = vmatpush2.msra.mxu0 0.0
    %213 = vmatprep.mubr.f32.mxu0 0.0
    %214 = vmatmul.mubr.f32.gmra.mxu0 %v147
    %v215 = vpop.f32.mrf.mxu0
    %v216 = vadd.f32 0.0, %v215
    %v217 = vpop.f32.mrf.mxu0
    %218 = vdwg.mxu0
    %vm219 = vcmask 253952
    %220 = vst.msk [vmem:[#allocation7] sm:$0x1] %vm219, %v216
    %v221 = vmul.f32 %v128, %v128
    %v222 = vmul.f32 %v133, %v133
    %v223 = vmul.f32 %v138, %v138
    %v224 = vmul.f32 %v143, %v143
    %225 = vmatprep.subr.mxu0 0.0
    %226 = vmatpush1.msra.mxu0 0.0
    %227 = vmatprep.subr.mxu0 0.0
    %228 = vmatpush1.msra.mxu0 0.0
    %229 = vmatprep.subr.mxu0 0.0
    %230 = vmatpush1.msra.mxu0 0.0
    %231 = vmatprep.subr.mxu0 0.0
    %232 = vmatpush1.msra.mxu0 0.0
    %233 = vmatprep.subr.mxu0 0.0
    %234 = vmatpush1.msra.mxu0 0.0
    %235 = vmatprep.subr.mxu0 0.0
    %236 = vmatpush1.msra.mxu0 0.0
    %237 = vmatprep.subr.mxu0 0.0
    %238 = vmatpush1.msra.mxu0 0.0
    %239 = vmatprep.subr.mxu0 0.0
    %240 = vmatpush1.msra.mxu0 0.0
    %241 = vmatprep.subr.mxu0 0.0
    %242 = vmatpush1.msra.mxu0 0.0
    %243 = vmatprep.subr.mxu0 0.0
    %244 = vmatpush1.msra.mxu0 0.0
    %245 = vmatprep.subr.mxu0 0.0
    %246 = vmatpush1.msra.mxu0 0.0
    %247 = vmatprep.subr.mxu0 0.0
    %248 = vmatpush1.msra.mxu0 0.0
    %249 = vmatprep.subr.mxu0 0.0
    %250 = vmatpush1.msra.mxu0 %v224
    %251 = vmatprep.subr.mxu0 0.0
    %252 = vmatpush1.msra.mxu0 %v223
    %253 = vmatprep.subr.mxu0 0.0
    %254 = vmatpush1.msra.mxu0 %v222
    %255 = vmatprep.subr.mxu0 0.0
    %256 = vmatpush1.msra.mxu0 %v221
    %257 = vmatprep.subr.mxu0 0.0
    %258 = vmatpush2.msra.mxu0 0.0
    %259 = vmatprep.subr.mxu0 0.0
    %260 = vmatpush2.msra.mxu0 0.0
    %261 = vmatprep.subr.mxu0 0.0
    %262 = vmatpush2.msra.mxu0 0.0
    %263 = vmatprep.subr.mxu0 0.0
    %264 = vmatpush2.msra.mxu0 0.0
    %265 = vmatprep.subr.mxu0 0.0
    %266 = vmatpush2.msra.mxu0 0.0
    %267 = vmatprep.subr.mxu0 0.0
    %268 = vmatpush2.msra.mxu0 0.0
    %269 = vmatprep.subr.mxu0 0.0
    %270 = vmatpush2.msra.mxu0 0.0
    %271 = vmatprep.subr.mxu0 0.0
    %272 = vmatpush2.msra.mxu0 0.0
    %273 = vmatprep.subr.mxu0 0.0
    %274 = vmatpush2.msra.mxu0 0.0
    %275 = vmatprep.subr.mxu0 0.0
    %276 = vmatpush2.msra.mxu0 0.0
    %277 = vmatprep.subr.mxu0 0.0
    %278 = vmatpush2.msra.mxu0 0.0
    %279 = vmatprep.subr.mxu0 0.0
    %280 = vmatpush2.msra.mxu0 0.0
    %281 = vmatprep.subr.mxu0 0.0
    %282 = vmatpush2.msra.mxu0 0.0
    %283 = vmatprep.subr.mxu0 0.0
    %284 = vmatpush2.msra.mxu0 0.0
    %285 = vmatprep.subr.mxu0 0.0
    %286 = vmatpush2.msra.mxu0 0.0
    %287 = vmatprep.subr.mxu0 0.0
    %288 = vmatpush2.msra.mxu0 0.0
    %289 = vmatprep.mubr.f32.mxu0 0.0
    %290 = vmatmul.mubr.f32.gmra.mxu0 %v147
    %v291 = vpop.f32.mrf.mxu0
    %v292 = vadd.f32 0.0, %v291
    %v293 = vpop.f32.mrf.mxu0
    %294 = vdwg.mxu0
    %295 = vst.msk [vmem:[#allocation7 + $0x1] sm:$0x1] %vm219, %v292
    // Predicated region
    $region18: #{tpu_custom_call.1} parent=1 // pred_check
      _
    $region19: #{tpu_custom_call.1} parent=1 // pred_check_branch
      %297 = sbr.rel (0) target = $region21
    $region20: #{tpu_custom_call.1} parent=1 // pred_region
      %s299 = ssub.s32 32, 32
      %300 = vsyncadd [#allocation4], %s299
      %s302 = sshll.u32 [#allocation7], 4
      %s303 = int_to_ptr.vmem [resolvable:$true] %s302
      %305 = dma.vmem_to_hbm [thread:$0]  %s303, 32, %s2, [#allocation4]
    $region21: #{tpu_custom_call.1} parent=1 // pred_fallthru
      _
    // Predicated region
    $region22: #{tpu_custom_call.1} parent=1 // pred_check
      _
    $region23: #{tpu_custom_call.1} parent=1 // pred_check_branch
      %307 = sbr.rel (0) target = $region25
    $region24: #{tpu_custom_call.1} parent=1 // pred_region
      %308 = dma.done [#allocation4], 32
    $region25: #{tpu_custom_call.1} parent=1 // pred_fallthru
      _
    %309 = vsyncpa [#allocation3], 1
    %310 = vsyncpa [#allocation6], 1
    %311 = vsyncpa [#allocation4], 1

</llo_original>
